<compile_context>
chip_gen: v6e
topology: v6e:2x2x1
jax: 0.10.0
libtpu: 0.0.40
codegen_flags: <defaults>
</compile_context>

<pallas_src>
import jax
import jax.numpy as jnp
from jax.experimental import pallas as pl
from jax.experimental.pallas import tpu as pltpu


def _pointgen_kernel(x_ref,
                     w1_ref, b1_ref,
                     w2_ref, b2_ref,
                     w3_ref, b3_ref,
                     w4_ref, b4_ref,
                     wfc_ref, fcb_ref,
                     y_ref, s_ref,
                     sacc_ref):
    j = pl.program_id(1)
    nj = pl.num_programs(1)

    # ---- layer 1: folded conv1+bn1, bf16 bias + relu ----
    x = x_ref[0].astype(jnp.bfloat16)                 # no-op if x is already bf16
    h = jnp.dot(w1_ref[...], x, preferred_element_type=jnp.float32)
    h = jnp.maximum(h.astype(jnp.bfloat16) + b1_ref[...], 0.0)

    # ---- layer 2: folded conv2+bn2, bf16 bias + relu ----
    h = jnp.dot(w2_ref[...], h, preferred_element_type=jnp.float32)
    h = jnp.maximum(h.astype(jnp.bfloat16) + b2_ref[...], 0.0)

    # ---- layer 3: folded conv3+bn3, kept f32 (feeds the fc scale head) ----
    h = jnp.dot(w3_ref[...], h, preferred_element_type=jnp.float32)
    h3 = jnp.maximum(h + b3_ref[...], 0.0)            # (C3p, tn) f32

    # ---- scale head: elementwise-accumulate fc products in VMEM scratch ----
    prod = h3 * wfc_ref[...]                          # bf16 wfc promotes to f32

    @pl.when(j == 0)
    def _():
        sacc_ref[...] = prod

    @pl.when(j > 0)
    def _():
        sacc_ref[...] += prod

    @pl.when(j == nj - 1)
    def _():
        z = jnp.sum(sacc_ref[...]) + fcb_ref[...]     # single reduce, once per b
        s_ref[...] = pl.reciprocal(1.0 + jnp.exp(-z), approx=True)   # sigmoid

    # ---- point head: conv4 + tanh, lane-dense store ----
    y = jnp.dot(w4_ref[...], h3.astype(jnp.bfloat16),
                preferred_element_type=jnp.float32)
    y_ref[0] = jnp.tanh(y + b4_ref[...]).astype(y_ref.dtype)


# -------------------- wrapper --------------------

def _round_up(x, m):
    return -(-x // m) * m


def _const_spec(arr):
    """Full-array, constant-index BlockSpec; single-buffered (index never changes)."""
    idx = lambda b, j, _nd=arr.ndim: (0,) * _nd
    try:
        return pl.BlockSpec(arr.shape, idx, pipeline_mode=pl.Buffered(1))
    except TypeError:  # older BlockSpec signature without pipeline_mode
        return pl.BlockSpec(arr.shape, idx)


def _estimate_vmem_bytes(x_itemsize, C1, C1o, C2, C3, out_dim, tn):
    """Rough resident-VMEM estimate for one grid step (used to size tn)."""
    const = ((C1o * C1 + C2 * C1o + C3 * C2 + out_dim * C3) * 2   # bf16 weights, x1 buffer
             + (C1o + C2) * 2 + (C3 + out_dim) * 4                # biases
             + 128 * 4)                                           # fcb block
    stream = 2 * (C1 * tn * x_itemsize                            # x tile (double-buffered)
                  + out_dim * tn * 4                              # y tile
                  + C3 * tn * 2                                   # wfc tile (bf16)
                  + 128 * 4)                                      # s block
    scratch = C3 * tn * 4                                         # fc accumulator
    interm = (C1o + C2) * tn * 2 + 2 * C3 * tn * 4                # h1/h2 bf16, h3+prod f32
    return const + stream + scratch + interm


def pointgen_conscale_forward(x_ncw, kparams, *, tn=1024):
    """x_ncw: (B, C1, N) f32 (or bf16).  Returns (y: (B, out_dim, N) f32, s: (B, 1) f32)."""
    (w1, b1, w2, b2, w3, b3, w4, b4, wfc, fcb) = kparams
    B, C1, N = x_ncw.shape
    out_dim = w4.shape[0]
    C1o, C2, C3 = w1.shape[0], w2.shape[0], w3.shape[0]

    # ---- per-generation VMEM budget + point-tile selection ----
    try:
        vmem_cap = int(pltpu.get_tpu_info().vmem_capacity_bytes)
    except Exception:
        vmem_cap = 64 * 1024 * 1024         # conservative: v7x per-TensorCore VMEM
    budget = int(vmem_cap * 0.75)           # ~96 MiB on v5e/v6e, ~48 MiB on v7x

    tn = _round_up(max(128, min(tn, _round_up(N, 128))), 128)
    while tn > 128 and _estimate_vmem_bytes(
            x_ncw.dtype.itemsize, C1, C1o, C2, C3, out_dim, tn) > int(budget * 0.85):
        tn -= 128

    nj = -(-N // tn)                        # cdiv grid, no divisibility assert
    n_pad = nj * tn
    if n_pad != N:
        x_ncw = jnp.pad(x_ncw, ((0, 0), (0, 0), (0, n_pad - N)))
        # zero fc-weight columns -> padded points contribute nothing to s
        wfc = jnp.pad(wfc, ((0, 0), (0, n_pad - N)))

    y_pad, s_pad = pl.pallas_call(
        _pointgen_kernel,
        out_shape=(jax.ShapeDtypeStruct((B, out_dim, n_pad), jnp.float32),
                   jax.ShapeDtypeStruct((B, 1, 128), jnp.float32)),
        grid_spec=pltpu.PrefetchScalarGridSpec(
            num_scalar_prefetch=0,
            grid=(B, nj),
            in_specs=[
                pl.BlockSpec((1, C1, tn), lambda b, j: (b, 0, j)),   # x tile
                _const_spec(w1), _const_spec(b1),
                _const_spec(w2), _const_spec(b2),
                _const_spec(w3), _const_spec(b3),
                _const_spec(w4), _const_spec(b4),
                pl.BlockSpec((C3, tn), lambda b, j: (0, j)),         # fc weight tile
                _const_spec(fcb),
            ],
            out_specs=[
                pl.BlockSpec((1, out_dim, tn), lambda b, j: (b, 0, j)),
                pl.BlockSpec((1, 1, 128), lambda b, j: (b, 0, 0)),
            ],
            scratch_shapes=[pltpu.VMEM((C3, tn), jnp.float32)],      # fc accumulator
        ),
        compiler_params=pltpu.CompilerParams(
            dimension_semantics=("parallel", "arbitrary"),
            vmem_limit_bytes=budget),
    )(x_ncw, w1, b1, w2, b2, w3, b3, w4, b4, wfc, fcb)

    y = y_pad[:, :, :N] if n_pad != N else y_pad
    s = s_pad[:, 0, :1]
    return y, s


# -------------------- parameter prep (glue) --------------------

def make_raw_params(key, bottleneck_size, output_dim, num_points):
    """Deterministic synthetic parameters mirroring the PyTorch module shapes."""
    bs = bottleneck_size
    dims = [(bs, bs), (bs, bs // 2), (bs // 2, bs // 4), (bs // 4, output_dim)]
    keys = iter(jax.random.split(key, 32))

    def conv(cin, cout):  # Conv1d(cin, cout, 1): weight (cout, cin), bias (cout,)
        w = jax.random.normal(next(keys), (cout, cin), jnp.float32) / jnp.sqrt(cin)
        b = 0.1 * jax.random.normal(next(keys), (cout,), jnp.float32)
        return w, b

    def bn(c):
        gamma = 1.0 + 0.1 * jax.random.normal(next(keys), (c,), jnp.float32)
        beta = 0.1 * jax.random.normal(next(keys), (c,), jnp.float32)
        mean = 0.1 * jax.random.normal(next(keys), (c,), jnp.float32)
        var = jnp.abs(jax.random.normal(next(keys), (c,), jnp.float32)) + 0.5
        return gamma, beta, mean, var

    raw = {}
    raw['conv1'] = conv(*dims[0]); raw['bn1'] = bn(dims[0][1])
    raw['conv2'] = conv(*dims[1]); raw['bn2'] = bn(dims[1][1])
    raw['conv3'] = conv(*dims[2]); raw['bn3'] = bn(dims[2][1])
    raw['conv4'] = conv(*dims[3])
    c3 = dims[2][1]
    raw['fc_w'] = 0.02 * jax.random.normal(next(keys), (1, num_points * c3), jnp.float32)
    raw['fc_b'] = 0.1 * jax.random.normal(next(keys), (1,), jnp.float32)
    return raw


def _pad_channels(c):
    # MXU-tile alignment for production channel widths (2500->2560, 1250->1280,
    # 625->640); small dims only need sublane (8) alignment.
    return _round_up(c, 128) if c > 128 else _round_up(c, 8)


def fold_params(raw, num_points):
    """Fold conv bias + BatchNorm1d (inference) into weights/biases, zero-pad the
    intermediate channel dims to MXU-friendly sizes, and cast matmul operands to
    bf16.  Returns the kernel parameter tuple."""
    eps = 1e-5

    def fold(conv_wb, bn_p):
        w, cb = conv_wb
        gamma, beta, mean, var = bn_p
        scale = gamma / jnp.sqrt(var + eps)                    # per out-channel
        return w * scale[:, None], scale * (cb - mean) + beta

    w1f, b1f = fold(raw['conv1'], raw['bn1'])
    w2f, b2f = fold(raw['conv2'], raw['bn2'])
    w3f, b3f = fold(raw['conv3'], raw['bn3'])
    w4c, cb4 = raw['conv4']

    c1 = w1f.shape[1]                  # x channels stay unpadded (no extra HBM pass on x)
    c1o, c2, c3 = w1f.shape[0], w2f.shape[0], w3f.shape[0]
    c1op, c2p, c3p = _pad_channels(c1o), _pad_channels(c2), _pad_channels(c3)

    def padw(w, rows, cols):
        return jnp.pad(w, ((0, rows - w.shape[0]), (0, cols - w.shape[1])))

    def padb(b, rows, dtype):
        return jnp.pad(b, (0, rows - b.shape[0])).reshape(-1, 1).astype(dtype)

    # bf16 matmul weights; bf16 biases for layers 1-2 (bf16 bias+relu path);
    # f32 biases where the f32 path is kept (layer 3 feeds the fc head, conv4).
    w1 = padw(w1f, c1op, c1).astype(jnp.bfloat16)
    b1 = padb(b1f, c1op, jnp.bfloat16)
    w2 = padw(w2f, c2p, c1op).astype(jnp.bfloat16)
    b2 = padb(b2f, c2p, jnp.bfloat16)
    w3 = padw(w3f, c3p, c2p).astype(jnp.bfloat16)
    b3 = padb(b3f, c3p, jnp.float32)
    w4 = padw(w4c, w4c.shape[0], c3p).astype(jnp.bfloat16)
    b4 = cb4.reshape(-1, 1).astype(jnp.float32)

    # fc weight (1, C3*N) flattened as c*N + n  ->  (C3, N); zero rows for the
    # padded channels; bf16 halves its per-batch HBM re-stream.
    wfc = raw['fc_w'].reshape(c3, num_points)
    wfc = jnp.pad(wfc, ((0, c3p - c3), (0, 0))).astype(jnp.bfloat16)
    fcb = jnp.full((1, 1, 128), raw['fc_b'][0], jnp.float32)
    return (w1, b1, w2, b2, w3, b3, w4, b4, wfc, fcb)


# -------------------- pure-JAX reference (f32) --------------------

def reference_forward(x, raw):
    def conv(h, wb):
        w, b = wb
        return jnp.einsum('oi,bin->bon', w, h) + b[None, :, None]

    def bn(h, p, eps=1e-5):
        g, be, m, v = p
        return (h - m[None, :, None]) * (g / jnp.sqrt(v + eps))[None, :, None] \
            + be[None, :, None]

    B = x.shape[0]
    h = jax.nn.relu(bn(conv(x, raw['conv1']), raw['bn1']))
    h = jax.nn.relu(bn(conv(h, raw['conv2']), raw['bn2']))
    h = jax.nn.relu(bn(conv(h, raw['conv3']), raw['bn3']))
    s = jax.nn.sigmoid(h.reshape(B, -1) @ raw['fc_w'].T + raw['fc_b'])
    y = jnp.tanh(conv(h, raw['conv4']))
    return y, s


if __name__ == "__main__":
    # Small shapes consistent with the module (bottleneck_size, num_points shrunk).
    B = 2
    BOTTLENECK = 64       # stand-in for the 2500 default; C chain 64 -> 32 -> 16
    NUM_POINTS = 200      # N must equal num_points (fc layer), also exercises padding
    OUT_DIM = 2

    key = jax.random.PRNGKey(0)
    kx, kp = jax.random.split(key)
    x = jax.random.normal(kx, (B, BOTTLENECK, NUM_POINTS), jnp.float32)

    raw = make_raw_params(kp, BOTTLENECK, OUT_DIM, NUM_POINTS)
    kparams = fold_params(raw, NUM_POINTS)

    y, s = pointgen_conscale_forward(x, kparams)
    y = jax.block_until_ready(y)
    s = jax.block_until_ready(s)

    y_ref, s_ref = reference_forward(x, raw)
    assert y.shape == (B, OUT_DIM, NUM_POINTS)
    assert s.shape == (B, 1)
    # bf16 matmul operands / bf16 layer-1,2 intermediates -> inference-grade tolerance.
    assert jnp.allclose(y, y_ref, atol=5e-2, rtol=5e-2), \
        float(jnp.max(jnp.abs(y - y_ref)))
    assert jnp.allclose(s, s_ref, atol=5e-2, rtol=5e-2), \
        float(jnp.max(jnp.abs(s - s_ref)))

    print("KERNEL_OK")
</pallas_src>

<mosaic_0001>
module attributes {stable_mosaic.version = 11 : i64} {
  func.func @_pointgen_kernel(%arg0: i32, %arg1: i32, %arg2: memref<1x64x256xf32, #tpu.memory_space<vmem>>, %arg3: memref<64x64xbf16, #tpu.memory_space<vmem>>, %arg4: memref<64x1xbf16, #tpu.memory_space<vmem>>, %arg5: memref<32x64xbf16, #tpu.memory_space<vmem>>, %arg6: memref<32x1xbf16, #tpu.memory_space<vmem>>, %arg7: memref<16x32xbf16, #tpu.memory_space<vmem>>, %arg8: memref<16x1xf32, #tpu.memory_space<vmem>>, %arg9: memref<2x16xbf16, #tpu.memory_space<vmem>>, %arg10: memref<2x1xf32, #tpu.memory_space<vmem>>, %arg11: memref<16x256xbf16, #tpu.memory_space<vmem>>, %arg12: memref<1x1x128xf32, #tpu.memory_space<vmem>>, %arg13: memref<1x2x256xf32, #tpu.memory_space<vmem>>, %arg14: memref<1x1x128xf32, #tpu.memory_space<vmem>>, %arg15: memref<16x256xf32, #tpu.memory_space<vmem>>) attributes {dimension_semantics = [#tpu.dimension_semantics<parallel>, #tpu.dimension_semantics<arbitrary>], iteration_bounds = array<i64: 2, 1>, scalar_prefetch = 0 : i64, scratch_operands = 1 : i64, tpu.core_type = #tpu.core_type<tc>, window_params = [{transform_indices = @transform_0, window_bounds = array<i64: 1, 64, 256>}, {pipeline_mode = #tpu.pipeline_mode<synchronous>, transform_indices = @transform_1, window_bounds = array<i64: 64, 64>}, {pipeline_mode = #tpu.pipeline_mode<synchronous>, transform_indices = @transform_2, window_bounds = array<i64: 64, 1>}, {pipeline_mode = #tpu.pipeline_mode<synchronous>, transform_indices = @transform_3, window_bounds = array<i64: 32, 64>}, {pipeline_mode = #tpu.pipeline_mode<synchronous>, transform_indices = @transform_4, window_bounds = array<i64: 32, 1>}, {pipeline_mode = #tpu.pipeline_mode<synchronous>, transform_indices = @transform_5, window_bounds = array<i64: 16, 32>}, {pipeline_mode = #tpu.pipeline_mode<synchronous>, transform_indices = @transform_6, window_bounds = array<i64: 16, 1>}, {pipeline_mode = #tpu.pipeline_mode<synchronous>, transform_indices = @transform_7, window_bounds = array<i64: 2, 16>}, {pipeline_mode = #tpu.pipeline_mode<synchronous>, transform_indices = @transform_8, window_bounds = array<i64: 2, 1>}, {transform_indices = @transform_9, window_bounds = array<i64: 16, 256>}, {pipeline_mode = #tpu.pipeline_mode<synchronous>, transform_indices = @transform_10, window_bounds = array<i64: 1, 1, 128>}, {transform_indices = @transform_11, window_bounds = array<i64: 1, 2, 256>}, {transform_indices = @transform_12, window_bounds = array<i64: 1, 1, 128>}]} {
    %c0 = arith.constant 0 : index
    %c0_0 = arith.constant 0 : index
    %c0_1 = arith.constant 0 : index
    %0 = vector.load %arg2[%c0, %c0_0, %c0_1] : memref<1x64x256xf32, #tpu.memory_space<vmem>>, vector<1x64x256xf32>
    %1 = vector.shape_cast %0 : vector<1x64x256xf32> to vector<64x256xf32>
    %2 = arith.truncf %1 : vector<64x256xf32> to vector<64x256xbf16>
    %c0_2 = arith.constant 0 : index
    %c0_3 = arith.constant 0 : index
    %3 = vector.load %arg3[%c0_2, %c0_3] : memref<64x64xbf16, #tpu.memory_space<vmem>>, vector<64x64xbf16>
    %cst = arith.constant dense<0.000000e+00> : vector<64x256xf32>
    %4 = tpu.matmul %3, %2, %cst {dimension_numbers = #tpu.dot_dimension_numbers<[1], [0], [0], [1], [0, 0, 1, 1], [], []>} : vector<64x64xbf16>, vector<64x256xbf16>, vector<64x256xf32> -> vector<64x256xf32>
    %5 = arith.truncf %4 : vector<64x256xf32> to vector<64x256xbf16>
    %c0_4 = arith.constant 0 : index
    %c0_5 = arith.constant 0 : index
    %6 = vector.load %arg4[%c0_4, %c0_5] : memref<64x1xbf16, #tpu.memory_space<vmem>>, vector<64x1xbf16>
    %7 = vector.broadcast %6 : vector<64x1xbf16> to vector<64x256xbf16>
    %8 = arith.addf %5, %7 : vector<64x256xbf16>
    %cst_6 = arith.constant 0.000000e+00 : bf16
    %9 = vector.broadcast %cst_6 : bf16 to vector<64x256xbf16>
    %10 = arith.maximumf %8, %9 : vector<64x256xbf16>
    %c0_7 = arith.constant 0 : index
    %c0_8 = arith.constant 0 : index
    %11 = vector.load %arg5[%c0_7, %c0_8] : memref<32x64xbf16, #tpu.memory_space<vmem>>, vector<32x64xbf16>
    %cst_9 = arith.constant dense<0.000000e+00> : vector<32x256xf32>
    %12 = tpu.matmul %11, %10, %cst_9 {dimension_numbers = #tpu.dot_dimension_numbers<[1], [0], [0], [1], [0, 0, 1, 1], [], []>} : vector<32x64xbf16>, vector<64x256xbf16>, vector<32x256xf32> -> vector<32x256xf32>
    %13 = arith.truncf %12 : vector<32x256xf32> to vector<32x256xbf16>
    %c0_10 = arith.constant 0 : index
    %c0_11 = arith.constant 0 : index
    %14 = vector.load %arg6[%c0_10, %c0_11] : memref<32x1xbf16, #tpu.memory_space<vmem>>, vector<32x1xbf16>
    %15 = vector.broadcast %14 : vector<32x1xbf16> to vector<32x256xbf16>
    %16 = arith.addf %13, %15 : vector<32x256xbf16>
    %cst_12 = arith.constant 0.000000e+00 : bf16
    %17 = vector.broadcast %cst_12 : bf16 to vector<32x256xbf16>
    %18 = arith.maximumf %16, %17 : vector<32x256xbf16>
    %c0_13 = arith.constant 0 : index
    %c0_14 = arith.constant 0 : index
    %19 = vector.load %arg7[%c0_13, %c0_14] : memref<16x32xbf16, #tpu.memory_space<vmem>>, vector<16x32xbf16>
    %cst_15 = arith.constant dense<0.000000e+00> : vector<16x256xf32>
    %20 = tpu.matmul %19, %18, %cst_15 {dimension_numbers = #tpu.dot_dimension_numbers<[1], [0], [0], [1], [0, 0, 1, 1], [], []>} : vector<16x32xbf16>, vector<32x256xbf16>, vector<16x256xf32> -> vector<16x256xf32>
    %c0_16 = arith.constant 0 : index
    %c0_17 = arith.constant 0 : index
    %21 = vector.load %arg8[%c0_16, %c0_17] : memref<16x1xf32, #tpu.memory_space<vmem>>, vector<16x1xf32>
    %22 = vector.broadcast %21 : vector<16x1xf32> to vector<16x256xf32>
    %23 = arith.addf %20, %22 : vector<16x256xf32>
    %cst_18 = arith.constant 0.000000e+00 : f32
    %24 = vector.broadcast %cst_18 : f32 to vector<16x256xf32>
    %25 = arith.maximumf %23, %24 : vector<16x256xf32>
    %c0_19 = arith.constant 0 : index
    %c0_20 = arith.constant 0 : index
    %26 = vector.load %arg11[%c0_19, %c0_20] : memref<16x256xbf16, #tpu.memory_space<vmem>>, vector<16x256xbf16>
    %27 = arith.extf %26 : vector<16x256xbf16> to vector<16x256xf32>
    %28 = arith.mulf %25, %27 : vector<16x256xf32>
    %c0_i32 = arith.constant 0 : i32
    %29 = arith.cmpi eq, %arg1, %c0_i32 : i32
    %30 = arith.extui %29 : i1 to i32
    %c0_i32_21 = arith.constant 0 : i32
    %31 = arith.cmpi ne, %30, %c0_i32_21 : i32
    scf.if %31 {
      %c0_34 = arith.constant 0 : index
      %c0_35 = arith.constant 0 : index
      %48 = vector.load %arg15[%c0_34, %c0_35] : memref<16x256xf32, #tpu.memory_space<vmem>>, vector<16x256xf32>
      tpu.vector_store %arg15[%c0_34, %c0_35], %28 {strides = array<i32>} : memref<16x256xf32, #tpu.memory_space<vmem>>, vector<16x256xf32>,
    } else {
    }
    %c0_i32_22 = arith.constant 0 : i32
    %32 = arith.cmpi sgt, %arg1, %c0_i32_22 : i32
    %33 = arith.extui %32 : i1 to i32
    %c0_i32_23 = arith.constant 0 : i32
    %34 = arith.cmpi ne, %33, %c0_i32_23 : i32
    scf.if %34 {
      %c0_34 = arith.constant 0 : index
      %c0_35 = arith.constant 0 : index
      %48 = vector.load %arg15[%c0_34, %c0_35] : memref<16x256xf32, #tpu.memory_space<vmem>>, vector<16x256xf32>
      %49 = arith.addf %48, %28 : vector<16x256xf32>
      %c0_36 = arith.constant 0 : index
      %c0_37 = arith.constant 0 : index
      %50 = vector.load %arg15[%c0_36, %c0_37] : memref<16x256xf32, #tpu.memory_space<vmem>>, vector<16x256xf32>
      tpu.vector_store %arg15[%c0_36, %c0_37], %49 {strides = array<i32>} : memref<16x256xf32, #tpu.memory_space<vmem>>, vector<16x256xf32>,
    } else {
    }
    %c0_i32_24 = arith.constant 0 : i32
    %35 = arith.cmpi eq, %arg1, %c0_i32_24 : i32
    %36 = arith.extui %35 : i1 to i32
    %c0_i32_25 = arith.constant 0 : i32
    %37 = arith.cmpi ne, %36, %c0_i32_25 : i32
    scf.if %37 {
      %c0_34 = arith.constant 0 : index
      %c0_35 = arith.constant 0 : index
      %48 = vector.load %arg15[%c0_34, %c0_35] : memref<16x256xf32, #tpu.memory_space<vmem>>, vector<16x256xf32>
      %49 = vector.shape_cast %48 : vector<16x256xf32> to vector<1x16x256xf32>
      %cst_36 = arith.constant dense<0.000000e+00> : vector<1xf32>
      %50 = vector.multi_reduction <add>, %49, %cst_36 [1, 2] : vector<1x16x256xf32> to vector<1xf32>
      %51 = vector.shape_cast %50 : vector<1xf32> to vector<1x1x1xf32>
      %52 = vector.extract %51[0, 0, 0] : f32 from vector<1x1x1xf32>
      %c0_37 = arith.constant 0 : index
      %c0_38 = arith.constant 0 : index
      %c0_39 = arith.constant 0 : index
      %53 = vector.load %arg12[%c0_37, %c0_38, %c0_39] : memref<1x1x128xf32, #tpu.memory_space<vmem>>, vector<1x1x128xf32>
      %54 = vector.broadcast %52 : f32 to vector<1x1x128xf32>
      %55 = arith.addf %54, %53 : vector<1x1x128xf32>
      %cst_40 = arith.constant 0.000000e+00 : f32
      %56 = vector.broadcast %cst_40 : f32 to vector<1x1x128xf32>
      %57 = arith.subf %56, %55 : vector<1x1x128xf32>
      %58 = math.exp %57 : vector<1x1x128xf32>
      %cst_41 = arith.constant 1.000000e+00 : f32
      %59 = vector.broadcast %cst_41 : f32 to vector<1x1x128xf32>
      %60 = arith.addf %59, %58 : vector<1x1x128xf32>
      %61 = tpu.reciprocal %60 {approx = true} : vector<1x1x128xf32> -> vector<1x1x128xf32>
      %c0_42 = arith.constant 0 : index
      %c0_43 = arith.constant 0 : index
      %c0_44 = arith.constant 0 : index
      %62 = vector.load %arg14[%c0_42, %c0_43, %c0_44] : memref<1x1x128xf32, #tpu.memory_space<vmem>>, vector<1x1x128xf32>
      tpu.vector_store %arg14[%c0_42, %c0_43, %c0_44], %61 {strides = array<i32>} : memref<1x1x128xf32, #tpu.memory_space<vmem>>, vector<1x1x128xf32>,
    } else {
    }
    %c0_26 = arith.constant 0 : index
    %c0_27 = arith.constant 0 : index
    %38 = vector.load %arg9[%c0_26, %c0_27] : memref<2x16xbf16, #tpu.memory_space<vmem>>, vector<2x16xbf16>
    %39 = arith.truncf %25 : vector<16x256xf32> to vector<16x256xbf16>
    %cst_28 = arith.constant dense<0.000000e+00> : vector<2x256xf32>
    %40 = tpu.matmul %38, %39, %cst_28 {dimension_numbers = #tpu.dot_dimension_numbers<[1], [0], [0], [1], [0, 0, 1, 1], [], []>} : vector<2x16xbf16>, vector<16x256xbf16>, vector<2x256xf32> -> vector<2x256xf32>
    %c0_29 = arith.constant 0 : index
    %c0_30 = arith.constant 0 : index
    %41 = vector.load %arg10[%c0_29, %c0_30] : memref<2x1xf32, #tpu.memory_space<vmem>>, vector<2x1xf32>
    %42 = vector.broadcast %41 : vector<2x1xf32> to vector<2x256xf32>
    %43 = arith.addf %40, %42 : vector<2x256xf32>
    %44 = math.tanh %43 : vector<2x256xf32>
    %c0_31 = arith.constant 0 : index
    %c0_32 = arith.constant 0 : index
    %c0_33 = arith.constant 0 : index
    %45 = vector.load %arg13[%c0_31, %c0_32, %c0_33] : memref<1x2x256xf32, #tpu.memory_space<vmem>>, vector<1x2x256xf32>
    %46 = vector.shape_cast %45 : vector<1x2x256xf32> to vector<2x256xf32>
    %47 = vector.shape_cast %44 : vector<2x256xf32> to vector<1x2x256xf32>
    tpu.vector_store %arg13[%c0_31, %c0_32, %c0_33], %47 {strides = array<i32>} : memref<1x2x256xf32, #tpu.memory_space<vmem>>, vector<1x2x256xf32>,
    return
  }
  func.func @transform_0(%arg0: i32, %arg1: i32) -> (i32, i32, i32) {
    %c0_i32 = arith.constant 0 : i32
    %c0_i32_0 = arith.constant 0 : i32
    return %arg0, %c0_i32, %arg1 : i32, i32, i32
  }
  func.func @transform_1(%arg0: i32, %arg1: i32) -> (i32, i32) {
    %c0_i32 = arith.constant 0 : i32
    %c0_i32_0 = arith.constant 0 : i32
    %c0_i32_1 = arith.constant 0 : i32
    return %c0_i32, %c0_i32_0 : i32, i32
  }
  func.func @transform_2(%arg0: i32, %arg1: i32) -> (i32, i32) {
    %c0_i32 = arith.constant 0 : i32
    %c0_i32_0 = arith.constant 0 : i32
    %c0_i32_1 = arith.constant 0 : i32
    return %c0_i32, %c0_i32_0 : i32, i32
  }
  func.func @transform_3(%arg0: i32, %arg1: i32) -> (i32, i32) {
    %c0_i32 = arith.constant 0 : i32
    %c0_i32_0 = arith.constant 0 : i32
    %c0_i32_1 = arith.constant 0 : i32
    return %c0_i32, %c0_i32_0 : i32, i32
  }
  func.func @transform_4(%arg0: i32, %arg1: i32) -> (i32, i32) {
    %c0_i32 = arith.constant 0 : i32
    %c0_i32_0 = arith.constant 0 : i32
    %c0_i32_1 = arith.constant 0 : i32
    return %c0_i32, %c0_i32_0 : i32, i32
  }
  func.func @transform_5(%arg0: i32, %arg1: i32) -> (i32, i32) {
    %c0_i32 = arith.constant 0 : i32
    %c0_i32_0 = arith.constant 0 : i32
    %c0_i32_1 = arith.constant 0 : i32
    return %c0_i32, %c0_i32_0 : i32, i32
  }
  func.func @transform_6(%arg0: i32, %arg1: i32) -> (i32, i32) {
    %c0_i32 = arith.constant 0 : i32
    %c0_i32_0 = arith.constant 0 : i32
    %c0_i32_1 = arith.constant 0 : i32
    return %c0_i32, %c0_i32_0 : i32, i32
  }
  func.func @transform_7(%arg0: i32, %arg1: i32) -> (i32, i32) {
    %c0_i32 = arith.constant 0 : i32
    %c0_i32_0 = arith.constant 0 : i32
    %c0_i32_1 = arith.constant 0 : i32
    return %c0_i32, %c0_i32_0 : i32, i32
  }
  func.func @transform_8(%arg0: i32, %arg1: i32) -> (i32, i32) {
    %c0_i32 = arith.constant 0 : i32
    %c0_i32_0 = arith.constant 0 : i32
    %c0_i32_1 = arith.constant 0 : i32
    return %c0_i32, %c0_i32_0 : i32, i32
  }
  func.func @transform_9(%arg0: i32, %arg1: i32) -> (i32, i32) {
    %c0_i32 = arith.constant 0 : i32
    %c0_i32_0 = arith.constant 0 : i32
    return %c0_i32, %arg1 : i32, i32
  }
  func.func @transform_10(%arg0: i32, %arg1: i32) -> (i32, i32, i32) {
    %c0_i32 = arith.constant 0 : i32
    %c0_i32_0 = arith.constant 0 : i32
    %c0_i32_1 = arith.constant 0 : i32
    %c0_i32_2 = arith.constant 0 : i32
    return %c0_i32, %c0_i32_0, %c0_i32_1 : i32, i32, i32
  }
  func.func @transform_11(%arg0: i32, %arg1: i32) -> (i32, i32, i32) {
    %c0_i32 = arith.constant 0 : i32
    %c0_i32_0 = arith.constant 0 : i32
    return %arg0, %c0_i32, %arg1 : i32, i32, i32
  }
  func.func @transform_12(%arg0: i32, %arg1: i32) -> (i32, i32, i32) {
    %c0_i32 = arith.constant 0 : i32
    %c0_i32_0 = arith.constant 0 : i32
    %c0_i32_1 = arith.constant 0 : i32
    return %arg0, %c0_i32, %c0_i32_0 : i32, i32, i32
  }
}

</mosaic_0001>

<llo_original>
// kernel: tpu_custom_call.1
$region0: #{tpu_custom_call.1}
  #allocation0 [shape = 'u32[]', space=smem, size = 0x4, offset = 0x4, fixed_abs, tag = 'smem constant byte address 0x4 - core index']
  #allocation1 [shape = 'u32[144,128]{1,0:T(1,128)}', space=vmem, size = 0x12000, scoped, tag = 'internal scratch']
  #allocation2 [shape = 'f32[16,256]{1,0:T(8,128)}', space=vmem, size = 0x4000, scoped, tag = 'scratch operand']
  %s0 = inlined_call_operand.hbm [shape: f32[2,64,256], index: 0, kind: input, shape index: {}]
  %s1 = inlined_call_operand.vmem [shape: bf16[64,64], index: 1, kind: input, shape index: {}]
  %s2 = inlined_call_operand.vmem [shape: bf16[64,1], index: 2, kind: input, shape index: {}]
  %s3 = inlined_call_operand.vmem [shape: bf16[32,64], index: 3, kind: input, shape index: {}]
  %s4 = inlined_call_operand.vmem [shape: bf16[32,1], index: 4, kind: input, shape index: {}]
  %s5 = inlined_call_operand.vmem [shape: bf16[16,32], index: 5, kind: input, shape index: {}]
  %s6 = inlined_call_operand.vmem [shape: f32[16,1], index: 6, kind: input, shape index: {}]
  %s7 = inlined_call_operand.vmem [shape: bf16[2,16], index: 7, kind: input, shape index: {}]
  %s8 = inlined_call_operand.vmem [shape: f32[2,1], index: 8, kind: input, shape index: {}]
  %s9 = inlined_call_operand.vmem [shape: bf16[16,256], index: 9, kind: input, shape index: {}]
  %s10 = inlined_call_operand.vmem [shape: f32[1,1,128], index: 10, kind: input, shape index: {}]
  %s11 = inlined_call_operand.hbm [shape: f32[2,2,256], index: 11, kind: output, shape index: {0}]
  %s12 = inlined_call_operand.hbm [shape: f32[2,1,128], index: 12, kind: output, shape index: {1}]
  %13 = xla_tuple %s11, %s12
  %s14 = sld [smem:[#allocation0]]
  $region101: #{tpu_custom_call.1} parent=0
    _
  %s16 = ssub.s32 1, %s14
  %s17 = scalar_select 0, %s16, %s14
  $region1: #{tpu_custom_call.1} parent=0
    #allocation3 [shape = 'u8[131072]{0}', space=vmem, size = 0x20000, scoped, tag = 'input window, operand 0']
    #allocation4 [shape = 's32[2]{0}', space=sflag, size = 0x8, scoped, tag = 'scoped memory for tpu_custom_call.1']
    #allocation5 [shape = 's32[2]{0}', space=sflag, size = 0x8, scoped, tag = 'scoped memory for tpu_custom_call.1']
    #allocation6 [shape = 'u8[4096]{0}', space=vmem, size = 0x1000, scoped, tag = 'output window, operand 0']
    #allocation7 [shape = 'u8[1024]{0}', space=vmem, size = 0x400, scoped, tag = 'output window, operand 1']
    #allocation8 [shape = 's32[2]{0}', space=sflag, size = 0x8, scoped, tag = 'scoped memory for tpu_custom_call.1']
    %18 = vsyncpa [#allocation4], 0
    %s19 = scalar_lea.sflag [#allocation4], 1
    %20 = vsyncpa %s19, 0
    %21 = vsyncpa [#allocation5], 0
    %s22 = scalar_lea.sflag [#allocation5], 1
    %23 = vsyncpa %s22, 0
    %24 = vsyncpa [#allocation8], 0
    %s25 = scalar_lea.sflag [#allocation8], 1
    %26 = vsyncpa %s25, 0
    loop: start=0, step=1, limit=4
    $region2: #{tpu_custom_call.1} parent=1 // loop_pre_header
      _
    $region3: #{tpu_custom_call.1} parent=1 // loop_header
      %s28 = sphi 0, %s32
      %p29 = scmp.ge.s32.totalorder %s28, 4
      %s35 = sphi 0, %s47
      %s36 = sphi 0, %s43
      %s37 = sphi 0, %s35
      %s38 = sphi 0, %s36
      %s39 = sphi 0, %s37
      %s40 = sphi 0, %s38
      %s52 = sphi 0, %s54
      %s55 = sphi 0, %s52
      %s56 = sphi 0, %s55
      %s72 = sphi 0, %s56
      %s76 = sphi 0, %s76
      %s78 = sphi 0, %s76
      %s79 = sphi 0, %s78
      %s93 = sphi 0, %s79
      %s97 = sphi 0, %s97
      %s99 = sphi 0, %s97
      %s100 = sphi 0, %s99
      %s114 = sphi 0, %s100
      %s118 = sphi 0, %s118
      %s120 = sphi 0, %s118
      %s121 = sphi 0, %s120
      %s135 = sphi 0, %s121
      %s139 = sphi 0, %s139
      %s141 = sphi 0, %s139
      %s142 = sphi 0, %s141
      %s156 = sphi 0, %s142
      %s160 = sphi 0, %s160
      %s162 = sphi 0, %s160
      %s163 = sphi 0, %s162
      %s177 = sphi 0, %s163
      %s181 = sphi 0, %s181
      %s183 = sphi 0, %s181
      %s184 = sphi 0, %s183
      %s198 = sphi 0, %s184
      %s202 = sphi 0, %s202
      %s204 = sphi 0, %s202
      %s205 = sphi 0, %s204
      %s219 = sphi 0, %s205
      %s223 = sphi 0, %s223
      %s225 = sphi 0, %s223
      %s226 = sphi 0, %s225
      %s240 = sphi 0, %s226
      %s246 = sphi 0, %s248
      %s249 = sphi 0, %s246
      %s250 = sphi 0, %s249
      %s266 = sphi 0, %s250
      %s270 = sphi 0, %s270
      %s272 = sphi 0, %s270
      %s273 = sphi 0, %s272
      %s287 = sphi 0, %s273
      %s295 = sphi 0, %s297
      %s298 = sphi 0, %s295
      %s299 = sphi 0, %s298
      %s315 = sphi 0, %s299
      %s321 = sphi 0, %s323
      %s324 = sphi 0, %s321
      %s325 = sphi 0, %s324
      %s341 = sphi 0, %s325
    $region4: #{tpu_custom_call.1} parent=1 // loop_header_branch
      %31 = sbr.rel (%p29) target = $region8
    $region5: #{tpu_custom_call.1} parent=1 // loop_body
      %s33 = ssub.s32 %s28, 1
      %s34 = ssub.s32 %s28, 2
      %s41 = sadd.s32 1, %s36
      %p42 = scmp.ge.s32.totalorder %s41, 1
      %s43 = scalar_select %p42, 0, %s41
      %s44 = sadd.s32 1, %s35
      %s45 = scalar_select %p42, %s44, %s35
      %p46 = scmp.ge.s32.totalorder %s45, 2
      %s47 = scalar_select %p46, 0, %s45
      %s48 = ssub.s32 %s35, %s47
      %s49 = ssub.s32 %s36, %s43
      %s50 = sor.u32 %s48, %s49
      %p51 = scmp.eq.s32.totalorder %s50, 0
      %s53 = sadd.s32 %s52, 1
      %s54 = scalar_select %p51, %s52, %s53
      %p57 = pneg %p51
      %p58 = scmp.eq.s32.totalorder %s28, 1
      %p59 = por %p57, %p58
      %p60 = scmp.ne.s32.totalorder %s52, %s55
      %p61 = scmp.eq.s32.totalorder %s28, 0
      %p62 = por %p60, %p61
      %p63 = scmp.ne.s32.totalorder %s52, %s55
      %p64 = scmp.eq.s32.totalorder %s33, 1
      %p65 = por %p63, %p64
      %p66 = scmp.ne.s32.totalorder %s55, %s56
      %p67 = scmp.eq.s32.totalorder %s33, 0
      %p68 = por %p66, %p67
      %p69 = scmp.ne.s32.totalorder %s55, %s56
      %p70 = scmp.eq.s32.totalorder %s34, 1
      %p71 = por %p69, %p70
      %p73 = scmp.ne.s32.totalorder %s56, %s72
      %p74 = scmp.eq.s32.totalorder %s34, 0
      %p75 = por %p73, %p74
      %s77 = sadd.s32 %s76, 1
      %p80 = scmp.eq.s32.totalorder %s28, 1
      %p81 = scmp.ne.s32.totalorder %s76, %s78
      %p82 = scmp.eq.s32.totalorder %s28, 0
      %p83 = por %p81, %p82
      %p84 = scmp.ne.s32.totalorder %s76, %s78
      %p85 = scmp.eq.s32.totalorder %s33, 1
      %p86 = por %p84, %p85
      %p87 = scmp.ne.s32.totalorder %s78, %s79
      %p88 = scmp.eq.s32.totalorder %s33, 0
      %p89 = por %p87, %p88
      %p90 = scmp.ne.s32.totalorder %s78, %s79
      %p91 = scmp.eq.s32.totalorder %s34, 1
      %p92 = por %p90, %p91
      %p94 = scmp.ne.s32.totalorder %s79, %s93
      %p95 = scmp.eq.s32.totalorder %s34, 0
      %p96 = por %p94, %p95
      %s98 = sadd.s32 %s97, 1
      %p101 = scmp.eq.s32.totalorder %s28, 1
      %p102 = scmp.ne.s32.totalorder %s97, %s99
      %p103 = scmp.eq.s32.totalorder %s28, 0
      %p104 = por %p102, %p103
      %p105 = scmp.ne.s32.totalorder %s97, %s99
      %p106 = scmp.eq.s32.totalorder %s33, 1
      %p107 = por %p105, %p106
      %p108 = scmp.ne.s32.totalorder %s99, %s100
      %p109 = scmp.eq.s32.totalorder %s33, 0
      %p110 = por %p108, %p109
      %p111 = scmp.ne.s32.totalorder %s99, %s100
      %p112 = scmp.eq.s32.totalorder %s34, 1
      %p113 = por %p111, %p112
      %p115 = scmp.ne.s32.totalorder %s100, %s114
      %p116 = scmp.eq.s32.totalorder %s34, 0
      %p117 = por %p115, %p116
      %s119 = sadd.s32 %s118, 1
      %p122 = scmp.eq.s32.totalorder %s28, 1
      %p123 = scmp.ne.s32.totalorder %s118, %s120
      %p124 = scmp.eq.s32.totalorder %s28, 0
      %p125 = por %p123, %p124
      %p126 = scmp.ne.s32.totalorder %s118, %s120
      %p127 = scmp.eq.s32.totalorder %s33, 1
      %p128 = por %p126, %p127
      %p129 = scmp.ne.s32.totalorder %s120, %s121
      %p130 = scmp.eq.s32.totalorder %s33, 0
      %p131 = por %p129, %p130
      %p132 = scmp.ne.s32.totalorder %s120, %s121
      %p133 = scmp.eq.s32.totalorder %s34, 1
      %p134 = por %p132, %p133
      %p136 = scmp.ne.s32.totalorder %s121, %s135
      %p137 = scmp.eq.s32.totalorder %s34, 0
      %p138 = por %p136, %p137
      %s140 = sadd.s32 %s139, 1
      %p143 = scmp.eq.s32.totalorder %s28, 1
      %p144 = scmp.ne.s32.totalorder %s139, %s141
      %p145 = scmp.eq.s32.totalorder %s28, 0
      %p146 = por %p144, %p145
      %p147 = scmp.ne.s32.totalorder %s139, %s141
      %p148 = scmp.eq.s32.totalorder %s33, 1
      %p149 = por %p147, %p148
      %p150 = scmp.ne.s32.totalorder %s141, %s142
      %p151 = scmp.eq.s32.totalorder %s33, 0
      %p152 = por %p150, %p151
      %p153 = scmp.ne.s32.totalorder %s141, %s142
      %p154 = scmp.eq.s32.totalorder %s34, 1
      %p155 = por %p153, %p154
      %p157 = scmp.ne.s32.totalorder %s142, %s156
      %p158 = scmp.eq.s32.totalorder %s34, 0
      %p159 = por %p157, %p158
      %s161 = sadd.s32 %s160, 1
      %p164 = scmp.eq.s32.totalorder %s28, 1
      %p165 = scmp.ne.s32.totalorder %s160, %s162
      %p166 = scmp.eq.s32.totalorder %s28, 0
      %p167 = por %p165, %p166
      %p168 = scmp.ne.s32.totalorder %s160, %s162
      %p169 = scmp.eq.s32.totalorder %s33, 1
      %p170 = por %p168, %p169
      %p171 = scmp.ne.s32.totalorder %s162, %s163
      %p172 = scmp.eq.s32.totalorder %s33, 0
      %p173 = por %p171, %p172
      %p174 = scmp.ne.s32.totalorder %s162, %s163
      %p175 = scmp.eq.s32.totalorder %s34, 1
      %p176 = por %p174, %p175
      %p178 = scmp.ne.s32.totalorder %s163, %s177
      %p179 = scmp.eq.s32.totalorder %s34, 0
      %p180 = por %p178, %p179
      %s182 = sadd.s32 %s181, 1
      %p185 = scmp.eq.s32.totalorder %s28, 1
      %p186 = scmp.ne.s32.totalorder %s181, %s183
      %p187 = scmp.eq.s32.totalorder %s28, 0
      %p188 = por %p186, %p187
      %p189 = scmp.ne.s32.totalorder %s181, %s183
      %p190 = scmp.eq.s32.totalorder %s33, 1
      %p191 = por %p189, %p190
      %p192 = scmp.ne.s32.totalorder %s183, %s184
      %p193 = scmp.eq.s32.totalorder %s33, 0
      %p194 = por %p192, %p193
      %p195 = scmp.ne.s32.totalorder %s183, %s184
      %p196 = scmp.eq.s32.totalorder %s34, 1
      %p197 = por %p195, %p196
      %p199 = scmp.ne.s32.totalorder %s184, %s198
      %p200 = scmp.eq.s32.totalorder %s34, 0
      %p201 = por %p199, %p200
      %s203 = sadd.s32 %s202, 1
      %p206 = scmp.eq.s32.totalorder %s28, 1
      %p207 = scmp.ne.s32.totalorder %s202, %s204
      %p208 = scmp.eq.s32.totalorder %s28, 0
      %p209 = por %p207, %p208
      %p210 = scmp.ne.s32.totalorder %s202, %s204
      %p211 = scmp.eq.s32.totalorder %s33, 1
      %p212 = por %p210, %p211
      %p213 = scmp.ne.s32.totalorder %s204, %s205
      %p214 = scmp.eq.s32.totalorder %s33, 0
      %p215 = por %p213, %p214
      %p216 = scmp.ne.s32.totalorder %s204, %s205
      %p217 = scmp.eq.s32.totalorder %s34, 1
      %p218 = por %p216, %p217
      %p220 = scmp.ne.s32.totalorder %s205, %s219
      %p221 = scmp.eq.s32.totalorder %s34, 0
      %p222 = por %p220, %p221
      %s224 = sadd.s32 %s223, 1
      %p227 = scmp.eq.s32.totalorder %s28, 1
      %p228 = scmp.ne.s32.totalorder %s223, %s225
      %p229 = scmp.eq.s32.totalorder %s28, 0
      %p230 = por %p228, %p229
      %p231 = scmp.ne.s32.totalorder %s223, %s225
      %p232 = scmp.eq.s32.totalorder %s33, 1
      %p233 = por %p231, %p232
      %p234 = scmp.ne.s32.totalorder %s225, %s226
      %p235 = scmp.eq.s32.totalorder %s33, 0
      %p236 = por %p234, %p235
      %p237 = scmp.ne.s32.totalorder %s225, %s226
      %p238 = scmp.eq.s32.totalorder %s34, 1
      %p239 = por %p237, %p238
      %p241 = scmp.ne.s32.totalorder %s226, %s240
      %p242 = scmp.eq.s32.totalorder %s34, 0
      %p243 = por %p241, %p242
      %s244 = ssub.s32 %s36, %s43
      %p245 = scmp.eq.s32.totalorder %s244, 0
      %s247 = sadd.s32 %s246, 1
      %s248 = scalar_select %p245, %s246, %s247
      %p251 = pneg %p245
      %p252 = scmp.eq.s32.totalorder %s28, 1
      %p253 = por %p251, %p252
      %p254 = scmp.ne.s32.totalorder %s246, %s249
      %p255 = scmp.eq.s32.totalorder %s28, 0
      %p256 = por %p254, %p255
      %p257 = scmp.ne.s32.totalorder %s246, %s249
      %p258 = scmp.eq.s32.totalorder %s33, 1
      %p259 = por %p257, %p258
      %p260 = scmp.ne.s32.totalorder %s249, %s250
      %p261 = scmp.eq.s32.totalorder %s33, 0
      %p262 = por %p260, %p261
      %p263 = scmp.ne.s32.totalorder %s249, %s250
      %p264 = scmp.eq.s32.totalorder %s34, 1
      %p265 = por %p263, %p264
      %p267 = scmp.ne.s32.totalorder %s250, %s266
      %p268 = scmp.eq.s32.totalorder %s34, 0
      %p269 = por %p267, %p268
      %s271 = sadd.s32 %s270, 1
      %p274 = scmp.eq.s32.totalorder %s28, 1
      %p275 = scmp.ne.s32.totalorder %s270, %s272
      %p276 = scmp.eq.s32.totalorder %s28, 0
      %p277 = por %p275, %p276
      %p278 = scmp.ne.s32.totalorder %s270, %s272
      %p279 = scmp.eq.s32.totalorder %s33, 1
      %p280 = por %p278, %p279
      %p281 = scmp.ne.s32.totalorder %s272, %s273
      %p282 = scmp.eq.s32.totalorder %s33, 0
      %p283 = por %p281, %p282
      %p284 = scmp.ne.s32.totalorder %s272, %s273
      %p285 = scmp.eq.s32.totalorder %s34, 1
      %p286 = por %p284, %p285
      %p288 = scmp.ne.s32.totalorder %s273, %s287
      %p289 = scmp.eq.s32.totalorder %s34, 0
      %p290 = por %p288, %p289
      %s291 = ssub.s32 %s35, %s47
      %s292 = ssub.s32 %s36, %s43
      %s293 = sor.u32 %s291, %s292
      %p294 = scmp.eq.s32.totalorder %s293, 0
      %s296 = sadd.s32 %s295, 1
      %s297 = scalar_select %p294, %s295, %s296
      %p300 = pneg %p294
      %p301 = scmp.eq.s32.totalorder %s28, 1
      %p302 = por %p300, %p301
      %p303 = scmp.ne.s32.totalorder %s295, %s298
      %p304 = scmp.eq.s32.totalorder %s28, 0
      %p305 = por %p303, %p304
      %p306 = scmp.ne.s32.totalorder %s295, %s298
      %p307 = scmp.eq.s32.totalorder %s33, 1
      %p308 = por %p306, %p307
      %p309 = scmp.ne.s32.totalorder %s298, %s299
      %p310 = scmp.eq.s32.totalorder %s33, 0
      %p311 = por %p309, %p310
      %p312 = scmp.ne.s32.totalorder %s298, %s299
      %p313 = scmp.eq.s32.totalorder %s34, 1
      %p314 = por %p312, %p313
      %p316 = scmp.ne.s32.totalorder %s299, %s315
      %p317 = scmp.eq.s32.totalorder %s34, 0
      %p318 = por %p316, %p317
      %s319 = ssub.s32 %s35, %s47
      %p320 = scmp.eq.s32.totalorder %s319, 0
      %s322 = sadd.s32 %s321, 1
      %s323 = scalar_select %p320, %s321, %s322
      %p326 = pneg %p320
      %p327 = scmp.eq.s32.totalorder %s28, 1
      %p328 = por %p326, %p327
      %p329 = scmp.ne.s32.totalorder %s321, %s324
      %p330 = scmp.eq.s32.totalorder %s28, 0
      %p331 = por %p329, %p330
      %p332 = scmp.ne.s32.totalorder %s321, %s324
      %p333 = scmp.eq.s32.totalorder %s33, 1
      %p334 = por %p332, %p333
      %p335 = scmp.ne.s32.totalorder %s324, %s325
      %p336 = scmp.eq.s32.totalorder %s33, 0
      %p337 = por %p335, %p336
      %p338 = scmp.ne.s32.totalorder %s324, %s325
      %p339 = scmp.eq.s32.totalorder %s34, 1
      %p340 = por %p338, %p339
      %p342 = scmp.ne.s32.totalorder %s325, %s341
      %p343 = scmp.eq.s32.totalorder %s34, 0
      %p344 = por %p342, %p343
      %p345 = scmp.le.s32.totalorder 1, %s28
      %p346 = scmp.lt.s32.totalorder %s28, 3
      %p347 = pnand %p345, %p346
      %p348 = pneg %p347
      // Predicated region
      $region9: #{tpu_custom_call.1} parent=5 // pred_check
        _
      $region10: #{tpu_custom_call.1} parent=5 // pred_check_branch
        %350 = sbr.rel (%p347) target = $region12
      $region11: #{tpu_custom_call.1} parent=5 // pred_region
        %s351 = ssub.s32 %s28, 1
        // Predicated region
        $region13: #{tpu_custom_call.1} parent=11 // pred_check
          %p352 = pneg %p89
        $region14: #{tpu_custom_call.1} parent=11 // pred_check_branch
          %354 = sbr.rel (%p352) target = $region16
        $region15: #{tpu_custom_call.1} parent=11 // pred_region
          _
        $region16: #{tpu_custom_call.1} parent=11 // pred_fallthru
          _
        // Predicated region
        $region17: #{tpu_custom_call.1} parent=11 // pred_check
          %p355 = pneg %p110
        $region18: #{tpu_custom_call.1} parent=11 // pred_check_branch
          %357 = sbr.rel (%p355) target = $region20
        $region19: #{tpu_custom_call.1} parent=11 // pred_region
          _
        $region20: #{tpu_custom_call.1} parent=11 // pred_fallthru
          _
        // Predicated region
        $region21: #{tpu_custom_call.1} parent=11 // pred_check
          %p358 = pneg %p131
        $region22: #{tpu_custom_call.1} parent=11 // pred_check_branch
          %360 = sbr.rel (%p358) target = $region24
        $region23: #{tpu_custom_call.1} parent=11 // pred_region
          _
        $region24: #{tpu_custom_call.1} parent=11 // pred_fallthru
          _
        // Predicated region
        $region25: #{tpu_custom_call.1} parent=11 // pred_check
          %p361 = pneg %p152
        $region26: #{tpu_custom_call.1} parent=11 // pred_check_branch
          %363 = sbr.rel (%p361) target = $region28
        $region27: #{tpu_custom_call.1} parent=11 // pred_region
          _
        $region28: #{tpu_custom_call.1} parent=11 // pred_fallthru
          _
        // Predicated region
        $region29: #{tpu_custom_call.1} parent=11 // pred_check
          %p364 = pneg %p173
        $region30: #{tpu_custom_call.1} parent=11 // pred_check_branch
          %366 = sbr.rel (%p364) target = $region32
        $region31: #{tpu_custom_call.1} parent=11 // pred_region
          _
        $region32: #{tpu_custom_call.1} parent=11 // pred_fallthru
          _
        // Predicated region
        $region33: #{tpu_custom_call.1} parent=11 // pred_check
          %p367 = pneg %p194
        $region34: #{tpu_custom_call.1} parent=11 // pred_check_branch
          %369 = sbr.rel (%p367) target = $region36
        $region35: #{tpu_custom_call.1} parent=11 // pred_region
          _
        $region36: #{tpu_custom_call.1} parent=11 // pred_fallthru
          _
        // Predicated region
        $region37: #{tpu_custom_call.1} parent=11 // pred_check
          %p370 = pneg %p215
        $region38: #{tpu_custom_call.1} parent=11 // pred_check_branch
          %372 = sbr.rel (%p370) target = $region40
        $region39: #{tpu_custom_call.1} parent=11 // pred_region
          _
        $region40: #{tpu_custom_call.1} parent=11 // pred_fallthru
          _
        // Predicated region
        $region41: #{tpu_custom_call.1} parent=11 // pred_check
          %p373 = pneg %p236
        $region42: #{tpu_custom_call.1} parent=11 // pred_check_branch
          %375 = sbr.rel (%p373) target = $region44
        $region43: #{tpu_custom_call.1} parent=11 // pred_region
          _
        $region44: #{tpu_custom_call.1} parent=11 // pred_fallthru
          _
        // Predicated region
        $region45: #{tpu_custom_call.1} parent=11 // pred_check
          %p376 = pneg %p262
        $region46: #{tpu_custom_call.1} parent=11 // pred_check_branch
          %378 = sbr.rel (%p376) target = $region48
        $region47: #{tpu_custom_call.1} parent=11 // pred_region
          %s379 = smul.u32 2, %s38
          %p380 = scmp.lt.s32.totalorder %s379, 1
          %s381 = scalar_select %p380, %s379, 1
          %s382 = smul.addr %s381, 4
          %s383 = scalar_lea.vmem %s9, %s382
          %s384 = smul.u32 2, %s38
        $region48: #{tpu_custom_call.1} parent=11 // pred_fallthru
          _
        // Predicated region
        $region49: #{tpu_custom_call.1} parent=11 // pred_check
          %p385 = pneg %p283
        $region50: #{tpu_custom_call.1} parent=11 // pred_check_branch
          %387 = sbr.rel (%p385) target = $region52
        $region51: #{tpu_custom_call.1} parent=11 // pred_region
          _
        $region52: #{tpu_custom_call.1} parent=11 // pred_fallthru
          _
      $region12: #{tpu_custom_call.1} parent=5 // pred_fallthru
        _
      %p388 = scmp.lt.s32.totalorder %s28, 2
      // Predicated region
      $region53: #{tpu_custom_call.1} parent=5 // pred_check
        %p389 = pneg %p388
      $region54: #{tpu_custom_call.1} parent=5 // pred_check_branch
        %391 = sbr.rel (%p389) target = $region56
      $region55: #{tpu_custom_call.1} parent=5 // pred_region
        // Predicated region
        $region57: #{tpu_custom_call.1} parent=55 // pred_check
          %p392 = pneg %p62
        $region58: #{tpu_custom_call.1} parent=55 // pred_check_branch
          %394 = sbr.rel (%p392) target = $region60
        $region59: #{tpu_custom_call.1} parent=55 // pred_region
          %s395 = sand.u32 %s52, 1
          %s396 = scalar_lea.sflag [#allocation4], %s395
          %s397 = sand.u32 %s52, 1
          %s398 = smul.addr %s397, 128
          %s399 = scalar_lea.vmem [#allocation3], %s398
          %s400 = smul.u32 2, %s36
          %s402 = ssub.s32 2048, 2048
          %403 = vsyncadd %s396, %s402
          %s404 = smul.addr %s35, 16
          %s405 = sadd.s32 %s400, %s404
          %s406 = smul.addr %s405, 128
          %s407 = scalar_lea.hbm %s0, %s406
          %s408 = sshll.u32 %s399, 4
          %s409 = int_to_ptr.vmem [resolvable:$true] %s408
          %414 = dma.hbm_to_vmem [thread:$0]  %s407, 2048, %s409, %s396, 256, 256, 16
        $region60: #{tpu_custom_call.1} parent=55 // pred_fallthru
          _
      $region56: #{tpu_custom_call.1} parent=5 // pred_fallthru
        _
      %p415 = scmp.le.s32.totalorder 1, %s28
      %p416 = scmp.lt.s32.totalorder %s28, 3
      %p417 = pnand %p415, %p416
      %p418 = pneg %p417
      // Predicated region
      $region61: #{tpu_custom_call.1} parent=5 // pred_check
        _
      $region62: #{tpu_custom_call.1} parent=5 // pred_check_branch
        %420 = sbr.rel (%p417) target = $region64
      $region63: #{tpu_custom_call.1} parent=5 // pred_region
        %s421 = ssub.s32 %s28, 1
        %s422 = sand.u32 %s55, 1
        %s423 = scalar_lea.sflag [#allocation4], %s422
        %s424 = sand.u32 %s55, 1
        %s425 = smul.addr %s424, 128
        %s426 = scalar_lea.vmem [#allocation3], %s425
        // Predicated region
        $region65: #{tpu_custom_call.1} parent=63 // pred_check
          %p427 = pneg %p68
        $region66: #{tpu_custom_call.1} parent=63 // pred_check_branch
          %429 = sbr.rel (%p427) target = $region68
        $region67: #{tpu_custom_call.1} parent=63 // pred_region
          %430 = dma.done %s423, 2048
        $region68: #{tpu_custom_call.1} parent=63 // pred_fallthru
          _
        %s431 = sand.u32 %s55, 1
        %s432 = scalar_lea.sflag [#allocation4], %s431
        %s433 = sand.u32 %s55, 1
        %s434 = smul.addr %s433, 128
        %s435 = scalar_lea.vmem [#allocation3], %s434
        %p436 = pneg %p68
        %p437 = pneg %p65
        %p438 = pneg %p89
        %p439 = pneg %p86
        %p440 = pneg %p110
        %p441 = pneg %p107
        %p442 = pneg %p131
        %p443 = pneg %p128
        %p444 = pneg %p152
        %p445 = pneg %p149
        %p446 = pneg %p173
        %p447 = pneg %p170
        %p448 = pneg %p194
        %p449 = pneg %p191
        %p450 = pneg %p215
        %p451 = pneg %p212
        %p452 = pneg %p236
        %p453 = pneg %p233
        %s454 = smul.u32 2, %s38
        %p455 = scmp.lt.s32.totalorder %s454, 1
        %s456 = scalar_select %p455, %s454, 1
        %s457 = smul.addr %s456, 4
        %s458 = scalar_lea.vmem %s9, %s457
        %p459 = pneg %p262
        %p460 = pneg %p259
        %p461 = pneg %p283
        %p462 = pneg %p280
        %p463 = pneg %p311
        %p464 = pneg %p308
        %s465 = sand.u32 %s298, 1
        %s466 = scalar_lea.sflag [#allocation5], %s465
        %s467 = sand.u32 %s298, 1
        %s468 = smul.addr %s467, 4
        %s469 = scalar_lea.vmem [#allocation6], %s468
        %p470 = pneg %p337
        %p471 = pneg %p334
        %s472 = sand.u32 %s324, 1
        %s473 = scalar_lea.sflag [#allocation8], %s472
        %s474 = sand.u32 %s324, 1
        %s475 = scalar_lea.vmem [#allocation7], %s474
        %s476 = smul.u32 2, %s38
        %s477 = smul.u32 2, %s38
        %p478 = scmp.lt.s32.totalorder %s477, 1
        %s479 = scalar_select %p478, %s477, 1
        %s480 = smul.addr %s479, 4
        %s481 = scalar_lea.vmem %s9, %s480
        %s482 = smul.u32 2, %s38
        %s483 = smul.u32 2, %s38
        %v485 = vld [vmem:[%s426] sm:$0xff]
        %v486 = vld [vmem:[%s426 + $0x8] sm:$0xff]
        %v487 = vld [vmem:[%s426 + $0x10] sm:$0xff]
        %v488 = vld [vmem:[%s426 + $0x18] sm:$0xff]
        %v489 = vld [vmem:[%s426 + $0x20] sm:$0xff]
        %v490 = vld [vmem:[%s426 + $0x28] sm:$0xff]
        %v491 = vld [vmem:[%s426 + $0x30] sm:$0xff]
        %v492 = vld [vmem:[%s426 + $0x38] sm:$0xff]
        %v493 = vld [vmem:[%s426 + $0x40] sm:$0xff]
        %v494 = vld [vmem:[%s426 + $0x48] sm:$0xff]
        %v495 = vld [vmem:[%s426 + $0x50] sm:$0xff]
        %v496 = vld [vmem:[%s426 + $0x58] sm:$0xff]
        %v497 = vld [vmem:[%s426 + $0x60] sm:$0xff]
        %v498 = vld [vmem:[%s426 + $0x68] sm:$0xff]
        %v499 = vld [vmem:[%s426 + $0x70] sm:$0xff]
        %v500 = vld [vmem:[%s426 + $0x78] sm:$0xff]
        %v501 = vpack.c.bf16 %v487, %v485
        %v502 = vpack.c.bf16 %v488, %v486
        %v503 = vpack.c.bf16 %v491, %v489
        %v504 = vpack.c.bf16 %v492, %v490
        %v505 = vpack.c.bf16 %v495, %v493
        %v506 = vpack.c.bf16 %v496, %v494
        %v507 = vpack.c.bf16 %v499, %v497
        %v508 = vpack.c.bf16 %v500, %v498
        %v509 = vld [vmem:[%s1] sm:$0xf]
        %v510 = vld [vmem:[%s1 + $0x4] sm:$0xf]
        %v511 = vld [vmem:[%s1 + $0x8] sm:$0xf]
        %v512 = vld [vmem:[%s1 + $0xc] sm:$0xf]
        %v513 = vld [vmem:[%s1 + $0x10] sm:$0xf]
        %v514 = vld [vmem:[%s1 + $0x14] sm:$0xf]
        %v515 = vld [vmem:[%s1 + $0x18] sm:$0xf]
        %v516 = vld [vmem:[%s1 + $0x1c] sm:$0xf]
        %v525 = vunpack.c.l.b16 %v509
        %v526 = vunpack.c.l.b16 %v510
        %v527 = vunpack.c.l.b16 %v511
        %v528 = vunpack.c.l.b16 %v512
        %v529 = vunpack.c.l.b16 %v513
        %v530 = vunpack.c.l.b16 %v514
        %v531 = vunpack.c.l.b16 %v515
        %v532 = vunpack.c.l.b16 %v516
        %v533 = vpack.c.b16 %v526, %v525
        %v534 = vpack.c.b16 %v528, %v527
        %v535 = vpack.c.b16 %v530, %v529
        %v536 = vpack.c.b16 %v532, %v531
        %vm537 = vcmask 523264
        %v539 = vsel %vm537, %v533, 0
        %v542 = vsel %vm537, %v534, 0
        %v545 = vsel %vm537, %v535, 0
        %v548 = vsel %vm537, %v536, 0
        %550 = vmatprep.subr.bf16.mxu0 0
        %551 = vmatpush1.bf16.msra.mxu0 0
        %552 = vmatprep.subr.bf16.mxu0 0
        %553 = vmatpush1.bf16.msra.mxu0 0
        %554 = vmatprep.subr.bf16.mxu0 0
        %555 = vmatpush1.bf16.msra.mxu0 0
        %556 = vmatprep.subr.bf16.mxu0 0
        %557 = vmatpush1.bf16.msra.mxu0 0
        %558 = vmatprep.subr.bf16.mxu0 %v508
        %559 = vmatpush1.bf16.msra.mxu0 %v507
        %560 = vmatprep.subr.bf16.mxu0 %v506
        %561 = vmatpush1.bf16.msra.mxu0 %v505
        %562 = vmatprep.subr.bf16.mxu0 %v504
        %563 = vmatpush1.bf16.msra.mxu0 %v503
        %564 = vmatprep.subr.bf16.mxu0 %v502
        %565 = vmatpush1.bf16.msra.mxu0 %v501
        %566 = vmatprep.subr.bf16.mxu0 0
        %567 = vmatpush2.bf16.msra.mxu0 0
        %568 = vmatprep.subr.bf16.mxu0 0
        %569 = vmatpush2.bf16.msra.mxu0 0
        %570 = vmatprep.subr.bf16.mxu0 0
        %571 = vmatpush2.bf16.msra.mxu0 0
        %572 = vmatprep.subr.bf16.mxu0 0
        %573 = vmatpush2.bf16.msra.mxu0 0
        %574 = vmatprep.subr.bf16.mxu0 0
        %575 = vmatpush2.bf16.msra.mxu0 0
        %576 = vmatprep.subr.bf16.mxu0 0
        %577 = vmatpush2.bf16.msra.mxu0 0
        %578 = vmatprep.subr.bf16.mxu0 0
        %579 = vmatpush2.bf16.msra.mxu0 0
        %580 = vmatprep.subr.bf16.mxu0 0
        %581 = vmatpush2.bf16.msra.mxu0 0
        %582 = vmatprep.mubr.bf16.mxu0 0
        %583 = vmatmul.mubr.bf16.gmra.mxu0 %v539
        %v584 = vpop.f32.mrf.mxu0
        %v585 = vadd.f32 0.0, %v584
        %v586 = vpop.f32.mrf.mxu0
        %v587 = vadd.f32 0.0, %v586
        %v588 = vpop.f32.mrf.mxu0
        %v589 = vadd.f32 0.0, %v588
        %v590 = vpop.f32.mrf.mxu0
        %v591 = vadd.f32 0.0, %v590
        %592 = vmatprep.mubr.bf16.mxu0 0
        %593 = vmatmul.mubr.bf16.gmra.mxu0 %v542
        %v594 = vpop.f32.mrf.mxu0
        %v595 = vadd.f32 0.0, %v594
        %v596 = vpop.f32.mrf.mxu0
        %v597 = vadd.f32 0.0, %v596
        %v598 = vpop.f32.mrf.mxu0
        %v599 = vadd.f32 0.0, %v598
        %v600 = vpop.f32.mrf.mxu0
        %v601 = vadd.f32 0.0, %v600
        %602 = vmatprep.mubr.bf16.mxu0 0
        %603 = vmatmul.mubr.bf16.gmra.mxu0 %v545
        %v604 = vpop.f32.mrf.mxu0
        %v605 = vadd.f32 0.0, %v604
        %v606 = vpop.f32.mrf.mxu0
        %v607 = vadd.f32 0.0, %v606
        %v608 = vpop.f32.mrf.mxu0
        %v609 = vadd.f32 0.0, %v608
        %v610 = vpop.f32.mrf.mxu0
        %v611 = vadd.f32 0.0, %v610
        %612 = vmatprep.mubr.bf16.mxu0 0
        %613 = vmatmul.mubr.bf16.gmra.mxu0 %v548
        %v614 = vpop.f32.mrf.mxu0
        %v615 = vadd.f32 0.0, %v614
        %v616 = vpop.f32.mrf.mxu0
        %v617 = vadd.f32 0.0, %v616
        %v618 = vpop.f32.mrf.mxu0
        %v619 = vadd.f32 0.0, %v618
        %v620 = vpop.f32.mrf.mxu0
        %v621 = vadd.f32 0.0, %v620
        %622 = vdwg.mxu0
        %v623 = vpack.c.bf16 %v589, %v585
        %v624 = vpack.c.bf16 %v591, %v587
        %v625 = vpack.c.bf16 %v599, %v595
        %v626 = vpack.c.bf16 %v601, %v597
        %v627 = vpack.c.bf16 %v609, %v605
        %v628 = vpack.c.bf16 %v611, %v607
        %v629 = vpack.c.bf16 %v619, %v615
        %v630 = vpack.c.bf16 %v621, %v617
        %v631 = vld [vmem:[%s2] sm:$0xf]
        %v632 = vld [vmem:[%s2 + $0x4] sm:$0xf]
        %v633 = vld [vmem:[%s2 + $0x8] sm:$0xf]
        %v634 = vld [vmem:[%s2 + $0xc] sm:$0xf]
        %v635 = vld [vmem:[%s2 + $0x10] sm:$0xf]
        %v636 = vld [vmem:[%s2 + $0x14] sm:$0xf]
        %v637 = vld [vmem:[%s2 + $0x18] sm:$0xf]
        %v638 = vld [vmem:[%s2 + $0x1c] sm:$0xf]
        %640 = vset.pattern.permute.xlu0 0
        %641 = vperm.xlu0 %640, %v631
        %v642 = vpop.permute.xlu0 %641
        %v645 = vunpack.c.l.s4 839922192
        %v646 = vunpack.c.0.s8 %v645
        %v647 = vlaneseq
        %v648 = vshrl.u32 %v647, 7
        %v649 = vsub.s32 %v646, %v648
        %v650 = vrot.slane %v642, %v649
        %652 = vset.pattern.permute.xlu0 0
        %653 = vperm.xlu0 %652, %v632
        %v654 = vpop.permute.xlu0 %653
        %v657 = vunpack.c.l.s4 839922192
        %v658 = vunpack.c.0.s8 %v657
        %v659 = vlaneseq
        %v660 = vshrl.u32 %v659, 7
        %v661 = vsub.s32 %v658, %v660
        %v662 = vrot.slane %v654, %v661
        %664 = vset.pattern.permute.xlu0 0
        %665 = vperm.xlu0 %664, %v633
        %v666 = vpop.permute.xlu0 %665
        %v669 = vunpack.c.l.s4 839922192
        %v670 = vunpack.c.0.s8 %v669
        %v671 = vlaneseq
        %v672 = vshrl.u32 %v671, 7
        %v673 = vsub.s32 %v670, %v672
        %v674 = vrot.slane %v666, %v673
        %676 = vset.pattern.permute.xlu0 0
        %677 = vperm.xlu0 %676, %v634
        %v678 = vpop.permute.xlu0 %677
        %v681 = vunpack.c.l.s4 839922192
        %v682 = vunpack.c.0.s8 %v681
        %v683 = vlaneseq
        %v684 = vshrl.u32 %v683, 7
        %v685 = vsub.s32 %v682, %v684
        %v686 = vrot.slane %v678, %v685
        %688 = vset.pattern.permute.xlu0 0
        %689 = vperm.xlu0 %688, %v635
        %v690 = vpop.permute.xlu0 %689
        %v693 = vunpack.c.l.s4 839922192
        %v694 = vunpack.c.0.s8 %v693
        %v695 = vlaneseq
        %v696 = vshrl.u32 %v695, 7
        %v697 = vsub.s32 %v694, %v696
        %v698 = vrot.slane %v690, %v697
        %700 = vset.pattern.permute.xlu0 0
        %701 = vperm.xlu0 %700, %v636
        %v702 = vpop.permute.xlu0 %701
        %v705 = vunpack.c.l.s4 839922192
        %v706 = vunpack.c.0.s8 %v705
        %v707 = vlaneseq
        %v708 = vshrl.u32 %v707, 7
        %v709 = vsub.s32 %v706, %v708
        %v710 = vrot.slane %v702, %v709
        %712 = vset.pattern.permute.xlu0 0
        %713 = vperm.xlu0 %712, %v637
        %v714 = vpop.permute.xlu0 %713
        %v717 = vunpack.c.l.s4 839922192
        %v718 = vunpack.c.0.s8 %v717
        %v719 = vlaneseq
        %v720 = vshrl.u32 %v719, 7
        %v721 = vsub.s32 %v718, %v720
        %v722 = vrot.slane %v714, %v721
        %724 = vset.pattern.permute.xlu0 0
        %725 = vperm.xlu0 %724, %v638
        %v726 = vpop.permute.xlu0 %725
        %v729 = vunpack.c.l.s4 839922192
        %v730 = vunpack.c.0.s8 %v729
        %v731 = vlaneseq
        %v732 = vshrl.u32 %v731, 7
        %v733 = vsub.s32 %v730, %v732
        %v734 = vrot.slane %v726, %v733
        %v743 = vunpack.c.l.b16 %v650
        %v744 = vunpack.c.l.b16 %v662
        %v745 = vunpack.c.l.b16 %v674
        %v746 = vunpack.c.l.b16 %v686
        %v747 = vunpack.c.l.b16 %v698
        %v748 = vunpack.c.l.b16 %v710
        %v749 = vunpack.c.l.b16 %v722
        %v750 = vunpack.c.l.b16 %v734
        %v751 = vpack.c.b16 %v744, %v743
        %v752 = vpack.c.b16 %v746, %v745
        %v753 = vpack.c.b16 %v748, %v747
        %v754 = vpack.c.b16 %v750, %v749
        %v759 = vadd.bf16 %v623, %v751
        %v760 = vadd.bf16 %v624, %v751
        %v761 = vadd.bf16 %v625, %v752
        %v762 = vadd.bf16 %v626, %v752
        %v763 = vadd.bf16 %v627, %v753
        %v764 = vadd.bf16 %v628, %v753
        %v765 = vadd.bf16 %v629, %v754
        %v766 = vadd.bf16 %v630, %v754
        %v767 = vmax.bf16 %v759, 0
        %v768 = vmax.bf16 %v760, 0
        %v769 = vmax.bf16 %v761, 0
        %v770 = vmax.bf16 %v762, 0
        %v771 = vmax.bf16 %v763, 0
        %v772 = vmax.bf16 %v764, 0
        %v773 = vmax.bf16 %v765, 0
        %v774 = vmax.bf16 %v766, 0
        %v775 = vld [vmem:[%s3] sm:$0xf]
        %v776 = vld [vmem:[%s3 + $0x4] sm:$0xf]
        %v777 = vld [vmem:[%s3 + $0x8] sm:$0xf]
        %v778 = vld [vmem:[%s3 + $0xc] sm:$0xf]
        %v783 = vunpack.c.l.b16 %v775
        %v784 = vunpack.c.l.b16 %v776
        %v785 = vunpack.c.l.b16 %v777
        %v786 = vunpack.c.l.b16 %v778
        %v787 = vpack.c.b16 %v784, %v783
        %v788 = vpack.c.b16 %v786, %v785
        %v790 = vsel %vm537, %v787, 0
        %v793 = vsel %vm537, %v788, 0
        %795 = vmatprep.subr.bf16.mxu0 0
        %796 = vmatpush1.bf16.msra.mxu0 0
        %797 = vmatprep.subr.bf16.mxu0 0
        %798 = vmatpush1.bf16.msra.mxu0 0
        %799 = vmatprep.subr.bf16.mxu0 0
        %800 = vmatpush1.bf16.msra.mxu0 0
        %801 = vmatprep.subr.bf16.mxu0 0
        %802 = vmatpush1.bf16.msra.mxu0 0
        %803 = vmatprep.subr.bf16.mxu0 %v774
        %804 = vmatpush1.bf16.msra.mxu0 %v773
        %805 = vmatprep.subr.bf16.mxu0 %v772
        %806 = vmatpush1.bf16.msra.mxu0 %v771
        %807 = vmatprep.subr.bf16.mxu0 %v770
        %808 = vmatpush1.bf16.msra.mxu0 %v769
        %809 = vmatprep.subr.bf16.mxu0 %v768
        %810 = vmatpush1.bf16.msra.mxu0 %v767
        %811 = vmatprep.subr.bf16.mxu0 0
        %812 = vmatpush2.bf16.msra.mxu0 0
        %813 = vmatprep.subr.bf16.mxu0 0
        %814 = vmatpush2.bf16.msra.mxu0 0
        %815 = vmatprep.subr.bf16.mxu0 0
        %816 = vmatpush2.bf16.msra.mxu0 0
        %817 = vmatprep.subr.bf16.mxu0 0
        %818 = vmatpush2.bf16.msra.mxu0 0
        %819 = vmatprep.subr.bf16.mxu0 0
        %820 = vmatpush2.bf16.msra.mxu0 0
        %821 = vmatprep.subr.bf16.mxu0 0
        %822 = vmatpush2.bf16.msra.mxu0 0
        %823 = vmatprep.subr.bf16.mxu0 0
        %824 = vmatpush2.bf16.msra.mxu0 0
        %825 = vmatprep.subr.bf16.mxu0 0
        %826 = vmatpush2.bf16.msra.mxu0 0
        %827 = vmatprep.mubr.bf16.mxu0 0
        %828 = vmatmul.mubr.bf16.gmra.mxu0 %v790
        %v829 = vpop.f32.mrf.mxu0
        %v830 = vadd.f32 0.0, %v829
        %v831 = vpop.f32.mrf.mxu0
        %v832 = vadd.f32 0.0, %v831
        %v833 = vpop.f32.mrf.mxu0
        %v834 = vadd.f32 0.0, %v833
        %v835 = vpop.f32.mrf.mxu0
        %v836 = vadd.f32 0.0, %v835
        %837 = vmatprep.mubr.bf16.mxu0 0
        %838 = vmatmul.mubr.bf16.gmra.mxu0 %v793
        %v839 = vpop.f32.mrf.mxu0
        %v840 = vadd.f32 0.0, %v839
        %v841 = vpop.f32.mrf.mxu0
        %v842 = vadd.f32 0.0, %v841
        %v843 = vpop.f32.mrf.mxu0
        %v844 = vadd.f32 0.0, %v843
        %v845 = vpop.f32.mrf.mxu0
        %v846 = vadd.f32 0.0, %v845
        %847 = vdwg.mxu0
        %v848 = vpack.c.bf16 %v834, %v830
        %v849 = vpack.c.bf16 %v836, %v832
        %v850 = vpack.c.bf16 %v844, %v840
        %v851 = vpack.c.bf16 %v846, %v842
        %v852 = vld [vmem:[%s4] sm:$0xf]
        %v853 = vld [vmem:[%s4 + $0x4] sm:$0xf]
        %v854 = vld [vmem:[%s4 + $0x8] sm:$0xf]
        %v855 = vld [vmem:[%s4 + $0xc] sm:$0xf]
        %857 = vset.pattern.permute.xlu0 0
        %858 = vperm.xlu0 %857, %v852
        %v859 = vpop.permute.xlu0 %858
        %v862 = vunpack.c.l.s4 839922192
        %v863 = vunpack.c.0.s8 %v862
        %v864 = vlaneseq
        %v865 = vshrl.u32 %v864, 7
        %v866 = vsub.s32 %v863, %v865
        %v867 = vrot.slane %v859, %v866
        %869 = vset.pattern.permute.xlu0 0
        %870 = vperm.xlu0 %869, %v853
        %v871 = vpop.permute.xlu0 %870
        %v874 = vunpack.c.l.s4 839922192
        %v875 = vunpack.c.0.s8 %v874
        %v876 = vlaneseq
        %v877 = vshrl.u32 %v876, 7
        %v878 = vsub.s32 %v875, %v877
        %v879 = vrot.slane %v871, %v878
        %881 = vset.pattern.permute.xlu0 0
        %882 = vperm.xlu0 %881, %v854
        %v883 = vpop.permute.xlu0 %882
        %v886 = vunpack.c.l.s4 839922192
        %v887 = vunpack.c.0.s8 %v886
        %v888 = vlaneseq
        %v889 = vshrl.u32 %v888, 7
        %v890 = vsub.s32 %v887, %v889
        %v891 = vrot.slane %v883, %v890
        %893 = vset.pattern.permute.xlu0 0
        %894 = vperm.xlu0 %893, %v855
        %v895 = vpop.permute.xlu0 %894
        %v898 = vunpack.c.l.s4 839922192
        %v899 = vunpack.c.0.s8 %v898
        %v900 = vlaneseq
        %v901 = vshrl.u32 %v900, 7
        %v902 = vsub.s32 %v899, %v901
        %v903 = vrot.slane %v895, %v902
        %v908 = vunpack.c.l.b16 %v867
        %v909 = vunpack.c.l.b16 %v879
        %v910 = vunpack.c.l.b16 %v891
        %v911 = vunpack.c.l.b16 %v903
        %v912 = vpack.c.b16 %v909, %v908
        %v913 = vpack.c.b16 %v911, %v910
        %v916 = vadd.bf16 %v848, %v912
        %v917 = vadd.bf16 %v849, %v912
        %v918 = vadd.bf16 %v850, %v913
        %v919 = vadd.bf16 %v851, %v913
        %v920 = vmax.bf16 %v916, 0
        %v921 = vmax.bf16 %v917, 0
        %v922 = vmax.bf16 %v918, 0
        %v923 = vmax.bf16 %v919, 0
        %v924 = vld [vmem:[%s5] sm:$0xf]
        %v925 = vld [vmem:[%s5 + $0x4] sm:$0xf]
        %v926 = vld [vmem:[%s6] sm:$0xff]
        %v927 = vld [vmem:[%s6 + $0x8] sm:$0xff]
        %929 = vset.pattern.permute.xlu0 0
        %930 = vperm.xlu0 %929, %v926
        %v931 = vpop.permute.xlu0 %930
        %934 = vset.pattern.permute.xlu0 0
        %935 = vperm.xlu0 %934, %v927
        %v936 = vpop.permute.xlu0 %935
        %v940 = vunpack.c.l.b16 %v924
        %v941 = vunpack.c.l.b16 %v925
        %v942 = vpack.c.b16 %v941, %v940
        %vm943 = vcmask 261120
        %v945 = vsel %vm943, %v942, 0
        %947 = vmatprep.subr.bf16.mxu0 0
        %948 = vmatpush1.bf16.msra.mxu0 0
        %949 = vmatprep.subr.bf16.mxu0 0
        %950 = vmatpush1.bf16.msra.mxu0 0
        %951 = vmatprep.subr.bf16.mxu0 0
        %952 = vmatpush1.bf16.msra.mxu0 0
        %953 = vmatprep.subr.bf16.mxu0 0
        %954 = vmatpush1.bf16.msra.mxu0 0
        %955 = vmatprep.subr.bf16.mxu0 0
        %956 = vmatpush1.bf16.msra.mxu0 0
        %957 = vmatprep.subr.bf16.mxu0 0
        %958 = vmatpush1.bf16.msra.mxu0 0
        %959 = vmatprep.subr.bf16.mxu0 %v923
        %960 = vmatpush1.bf16.msra.mxu0 %v922
        %961 = vmatprep.subr.bf16.mxu0 %v921
        %962 = vmatpush1.bf16.msra.mxu0 %v920
        %963 = vmatprep.subr.bf16.mxu0 0
        %964 = vmatpush2.bf16.msra.mxu0 0
        %965 = vmatprep.subr.bf16.mxu0 0
        %966 = vmatpush2.bf16.msra.mxu0 0
        %967 = vmatprep.subr.bf16.mxu0 0
        %968 = vmatpush2.bf16.msra.mxu0 0
        %969 = vmatprep.subr.bf16.mxu0 0
        %970 = vmatpush2.bf16.msra.mxu0 0
        %971 = vmatprep.subr.bf16.mxu0 0
        %972 = vmatpush2.bf16.msra.mxu0 0
        %973 = vmatprep.subr.bf16.mxu0 0
        %974 = vmatpush2.bf16.msra.mxu0 0
        %975 = vmatprep.subr.bf16.mxu0 0
        %976 = vmatpush2.bf16.msra.mxu0 0
        %977 = vmatprep.subr.bf16.mxu0 0
        %978 = vmatpush2.bf16.msra.mxu0 0
        %979 = vmatprep.mubr.bf16.mxu0 0
        %980 = vmatmul.mubr.bf16.gmra.mxu0 %v945
        %v981 = vpop.f32.mrf.mxu0
        %v982 = vadd.f32 %v931, %v981
        %v983 = vpop.f32.mrf.mxu0
        %v984 = vadd.f32 %v931, %v983
        %v985 = vpop.f32.mrf.mxu0
        %v986 = vadd.f32 %v936, %v985
        %v987 = vpop.f32.mrf.mxu0
        %v988 = vadd.f32 %v936, %v987
        %989 = vdwg.mxu0
        %v990 = vmax.f32 %v982, 0.0
        %v991 = vmax.f32 %v984, 0.0
        %v992 = vmax.f32 %v986, 0.0
        %v993 = vmax.f32 %v988, 0.0
        %v994 = vld [vmem:[%s481] sm:$0xff]
        %v995 = vld [vmem:[%s481 + $0x8] sm:$0xff]
        %v996 = vunpack.c.l.bf16 %v994
        %v997 = vunpack.c.h.bf16 %v994
        %v998 = vunpack.c.l.bf16 %v995
        %v999 = vunpack.c.h.bf16 %v995
        %v1000 = vmul.f32 %v990, %v996
        %v1001 = vmul.f32 %v991, %v997
        %v1002 = vmul.f32 %v992, %v998
        %v1003 = vmul.f32 %v993, %v999
        %p1004 = scmp.eq.s32.totalorder %s38, 0
        // Predicated region
        $region69: #{tpu_custom_call.1} parent=63 // pred_check
          %p1005 = pneg %p1004
        $region70: #{tpu_custom_call.1} parent=63 // pred_check_branch
          %1007 = sbr.rel (%p1005) target = $region72
        $region71: #{tpu_custom_call.1} parent=63 // pred_region
          %1008 = vst [vmem:[#allocation2] sm:$0xff] %v1000
          %1009 = vst [vmem:[#allocation2 + $0x8] sm:$0xff] %v1001
          %1010 = vst [vmem:[#allocation2 + $0x10] sm:$0xff] %v1002
          %1011 = vst [vmem:[#allocation2 + $0x18] sm:$0xff] %v1003
        $region72: #{tpu_custom_call.1} parent=63 // pred_fallthru
          _
        %p1012 = scmp.gt.s32.totalorder %s38, 0
        // Predicated region
        $region73: #{tpu_custom_call.1} parent=63 // pred_check
          %p1013 = pneg %p1012
        $region74: #{tpu_custom_call.1} parent=63 // pred_check_branch
          %1015 = sbr.rel (%p1013) target = $region76
        $region75: #{tpu_custom_call.1} parent=63 // pred_region
          %v1016 = vld [vmem:[#allocation2] sm:$0xff]
          %v1017 = vld [vmem:[#allocation2 + $0x8] sm:$0xff]
          %v1018 = vld [vmem:[#allocation2 + $0x10] sm:$0xff]
          %v1019 = vld [vmem:[#allocation2 + $0x18] sm:$0xff]
          %v1020 = vadd.f32 %v1016, %v1000
          %v1021 = vadd.f32 %v1017, %v1001
          %v1022 = vadd.f32 %v1018, %v1002
          %v1023 = vadd.f32 %v1019, %v1003
          %1024 = vst [vmem:[#allocation2] sm:$0xff] %v1020
          %1025 = vst [vmem:[#allocation2 + $0x8] sm:$0xff] %v1021
          %1026 = vst [vmem:[#allocation2 + $0x10] sm:$0xff] %v1022
          %1027 = vst [vmem:[#allocation2 + $0x18] sm:$0xff] %v1023
        $region76: #{tpu_custom_call.1} parent=63 // pred_fallthru
          _
        // Predicated region
        $region77: #{tpu_custom_call.1} parent=63 // pred_check
          %p1028 = pneg %p1004
        $region78: #{tpu_custom_call.1} parent=63 // pred_check_branch
          %1030 = sbr.rel (%p1028) target = $region80
        $region79: #{tpu_custom_call.1} parent=63 // pred_region
          %v1031 = vld [vmem:[#allocation2] sm:$0xff]
          %v1032 = vld [vmem:[#allocation2 + $0x8] sm:$0xff]
          %v1033 = vld [vmem:[#allocation2 + $0x10] sm:$0xff]
          %v1034 = vld [vmem:[#allocation2 + $0x18] sm:$0xff]
          %v1035 = vadd.f32 %v1031, %v1032
          %v1036 = vadd.f32 %v1035, %v1033
          %v1037 = vadd.f32 %v1036, %v1034
          %1038 = vadd.xlane.f32.xlu0 %v1037
          %v1039 = vpop.xlane.xlu0 %1038
          %v1040 = vrot.slane %v1039, 4
          %v1041 = vadd.f32 %v1039, %v1040
          %v1042 = vrot.slane %v1041, 2
          %v1043 = vadd.f32 %v1041, %v1042
          %v1044 = vrot.slane %v1043, 1
          %v1045 = vadd.f32 %v1043, %v1044
          %s1046 = vtos %v1045
          %v1047 = vld [vmem:[%s10] sm:$0x1]
          %v1048 = vstv %s1046
          %v1049 = vadd.f32 %v1048, %v1047
          %v1050 = vsub.f32 0.0, %v1049
          %v1051 = vmul.f32 %v1050, 1.442695
          %v1052 = vpow.pop %v1051
          %v1053 = vadd.f32 %v1052, 1.0
          %v1054 = vrcp.pop %v1053
          %1055 = vst [vmem:[%s475] sm:$0x1] %v1054
        $region80: #{tpu_custom_call.1} parent=63 // pred_fallthru
          _
        %v1056 = vld [vmem:[%s7] sm:$0x1]
        %v1057 = vpack.c.bf16 %v992, %v990
        %v1058 = vpack.c.bf16 %v993, %v991
        %v1059 = vld [vmem:[%s8] sm:$0x3]
        %1061 = vset.pattern.permute.xlu0 0
        %1062 = vperm.xlu0 %1061, %v1059
        %v1063 = vpop.permute.xlu0 %1062
        %vm1065 = vcmask 130048
        %v1067 = vsel %vm1065, %v1056, 0
        %1069 = vmatprep.subr.bf16.mxu0 0
        %1070 = vmatpush1.bf16.msra.mxu0 0
        %1071 = vmatprep.subr.bf16.mxu0 0
        %1072 = vmatpush1.bf16.msra.mxu0 0
        %1073 = vmatprep.subr.bf16.mxu0 0
        %1074 = vmatpush1.bf16.msra.mxu0 0
        %1075 = vmatprep.subr.bf16.mxu0 0
        %1076 = vmatpush1.bf16.msra.mxu0 0
        %1077 = vmatprep.subr.bf16.mxu0 0
        %1078 = vmatpush1.bf16.msra.mxu0 0
        %1079 = vmatprep.subr.bf16.mxu0 0
        %1080 = vmatpush1.bf16.msra.mxu0 0
        %1081 = vmatprep.subr.bf16.mxu0 0
        %1082 = vmatpush1.bf16.msra.mxu0 0
        %1083 = vmatprep.subr.bf16.mxu0 %v1058
        %1084 = vmatpush1.bf16.msra.mxu0 %v1057
        %1085 = vmatprep.subr.bf16.mxu0 0
        %1086 = vmatpush2.bf16.msra.mxu0 0
        %1087 = vmatprep.subr.bf16.mxu0 0
        %1088 = vmatpush2.bf16.msra.mxu0 0
        %1089 = vmatprep.subr.bf16.mxu0 0
        %1090 = vmatpush2.bf16.msra.mxu0 0
        %1091 = vmatprep.subr.bf16.mxu0 0
        %1092 = vmatpush2.bf16.msra.mxu0 0
        %1093 = vmatprep.subr.bf16.mxu0 0
        %1094 = vmatpush2.bf16.msra.mxu0 0
        %1095 = vmatprep.subr.bf16.mxu0 0
        %1096 = vmatpush2.bf16.msra.mxu0 0
        %1097 = vmatprep.subr.bf16.mxu0 0
        %1098 = vmatpush2.bf16.msra.mxu0 0
        %1099 = vmatprep.subr.bf16.mxu0 0
        %1100 = vmatpush2.bf16.msra.mxu0 0
        %1101 = vmatprep.mubr.bf16.mxu0 0
        %1102 = vmatmul.mubr.bf16.gmra.mxu0 %v1067
        %v1103 = vpop.f32.mrf.mxu0
        %v1104 = vadd.f32 %v1063, %v1103
        %v1105 = vpop.f32.mrf.mxu0
        %v1106 = vadd.f32 %v1063, %v1105
        %v1107 = vpop.f32.mrf.mxu0
        %v1108 = vpop.f32.mrf.mxu0
        %1109 = vdwg.mxu0
        %v1110 = vtanh.pop %v1104
        %v1111 = vtanh.pop %v1106
        %v1114 = vcombine.low %v1110, %v1111
        %v1116 = vunpack.c.l.s4 1983009808
        %v1117 = vunpack.c.0.s8 %v1116
        %v1118 = vlaneseq
        %v1119 = vshrl.u32 %v1118, 7
        %v1120 = vsub.s32 %v1117, %v1119
        %v1121 = vrot.slane %v1114, %v1120
        %1123 = vst [vmem:[%s469] sm:$0xf] %v1121
        %s1124 = sand.u32 %s298, 1
        %s1125 = scalar_lea.sflag [#allocation5], %s1124
        %s1126 = sand.u32 %s298, 1
        %s1127 = smul.addr %s1126, 4
        %s1128 = scalar_lea.vmem [#allocation6], %s1127
        %s1129 = sand.u32 %s324, 1
        %s1130 = scalar_lea.sflag [#allocation8], %s1129
        %s1131 = sand.u32 %s324, 1
        %s1132 = scalar_lea.vmem [#allocation7], %s1131
        // Predicated region
        $region81: #{tpu_custom_call.1} parent=63 // pred_check
          %p1133 = pneg %p308
        $region82: #{tpu_custom_call.1} parent=63 // pred_check_branch
          %1135 = sbr.rel (%p1133) target = $region84
        $region83: #{tpu_custom_call.1} parent=63 // pred_region
          %s1136 = smul.u32 2, %s38
          %s1138 = ssub.s32 64, 64
          %1139 = vsyncadd %s1125, %s1138
          %s1140 = smul.addr %s37, 2
          %s1141 = sadd.s32 %s1136, %s1140
          %s1142 = smul.addr %s1141, 32
          %s1143 = scalar_lea.hbm %s11, %s1142
          %s1145 = sshll.u32 %s1128, 4
          %s1146 = int_to_ptr.vmem [resolvable:$true] %s1145
          %1148 = dma.vmem_to_hbm [thread:$0]  %s1146, 64, %s1143, %s1125
        $region84: #{tpu_custom_call.1} parent=63 // pred_fallthru
          _
        // Predicated region
        $region85: #{tpu_custom_call.1} parent=63 // pred_check
          %p1149 = pneg %p334
        $region86: #{tpu_custom_call.1} parent=63 // pred_check_branch
          %1151 = sbr.rel (%p1149) target = $region88
        $region87: #{tpu_custom_call.1} parent=63 // pred_region
          %s1153 = ssub.s32 16, 16
          %1154 = vsyncadd %s1130, %s1153
          %s1155 = smul.addr %s37, 16
          %s1156 = scalar_lea.hbm %s12, %s1155
          %s1158 = sshll.u32 %s1132, 4
          %s1159 = int_to_ptr.vmem [resolvable:$true] %s1158
          %1161 = dma.vmem_to_hbm [thread:$0]  %s1159, 16, %s1156, %s1130
        $region88: #{tpu_custom_call.1} parent=63 // pred_fallthru
          _
      $region64: #{tpu_custom_call.1} parent=5 // pred_fallthru
        _
      %p1162 = scmp.le.s32.totalorder 2, %s28
      // Predicated region
      $region89: #{tpu_custom_call.1} parent=5 // pred_check
        %p1163 = pneg %p1162
      $region90: #{tpu_custom_call.1} parent=5 // pred_check_branch
        %1165 = sbr.rel (%p1163) target = $region92
      $region91: #{tpu_custom_call.1} parent=5 // pred_region
        %s1166 = ssub.s32 %s28, 2
        // Predicated region
        $region93: #{tpu_custom_call.1} parent=91 // pred_check
          %p1167 = pneg %p314
        $region94: #{tpu_custom_call.1} parent=91 // pred_check_branch
          %1169 = sbr.rel (%p1167) target = $region96
        $region95: #{tpu_custom_call.1} parent=91 // pred_region
          %s1170 = sand.u32 %s299, 1
          %s1171 = scalar_lea.sflag [#allocation5], %s1170
          %s1172 = sand.u32 %s299, 1
          %s1173 = smul.addr %s1172, 4
          %s1174 = scalar_lea.vmem [#allocation6], %s1173
          %1175 = dma.done %s1171, 64
        $region96: #{tpu_custom_call.1} parent=91 // pred_fallthru
          _
        // Predicated region
        $region97: #{tpu_custom_call.1} parent=91 // pred_check
          %p1176 = pneg %p340
        $region98: #{tpu_custom_call.1} parent=91 // pred_check_branch
          %1178 = sbr.rel (%p1176) target = $region100
        $region99: #{tpu_custom_call.1} parent=91 // pred_region
          %s1179 = sand.u32 %s325, 1
          %s1180 = scalar_lea.sflag [#allocation8], %s1179
          %s1181 = sand.u32 %s325, 1
          %s1182 = scalar_lea.vmem [#allocation7], %s1181
          %1183 = dma.done %s1180, 16
        $region100: #{tpu_custom_call.1} parent=91 // pred_fallthru
          _
      $region92: #{tpu_custom_call.1} parent=5 // pred_fallthru
        _
    $region6: #{tpu_custom_call.1} parent=1 // loop_footer
      %s32 = sadd.s32 1, %s28
    $region7: #{tpu_custom_call.1} parent=1 // loop_footer_branch
      %27 = sbr.rel target = $region3
    $region8: #{tpu_custom_call.1} parent=1 // loop_exit
      _
    %1184 = vsyncpa [#allocation4], 1
    %s1185 = scalar_lea.sflag [#allocation4], 1
    %1186 = vsyncpa %s1185, 1
    %1187 = vsyncpa [#allocation5], 1
    %s1188 = scalar_lea.sflag [#allocation5], 1
    %1189 = vsyncpa %s1188, 1
    %1190 = vsyncpa [#allocation8], 1
    %s1191 = scalar_lea.sflag [#allocation8], 1
    %1192 = vsyncpa %s1191, 1

</llo_original>
